<compile_context>
chip_gen: v7x
topology: tpu7x:2x2x1
jax: 0.10.0
libtpu: 0.0.40
codegen_flags: <defaults>
</compile_context>

<pallas_src>
import jax
import jax.numpy as jnp
from jax.experimental import pallas as pl
from jax.experimental.pallas import tpu as pltpu


def _round_up(n, m):
    return ((n + m - 1) // m) * m


def pgn_kernel(x_ref, w1_ref, b1_ref, w2_ref, b2_ref, o_ref):
    # Hidden layer: Linear(input_size, 128) + ReLU.
    # bf16 operands (MXU-native), f32 accumulation via preferred_element_type.
    h = jnp.dot(x_ref[...].astype(jnp.bfloat16),
                w1_ref[...].astype(jnp.bfloat16),
                preferred_element_type=jnp.float32)
    h = jnp.maximum(h + b1_ref[...], 0.0)            # f32 bias + ReLU on the VPU
    # Output layer: Linear(128, nb_actions). nb_actions <= 128 -> single MXU pass,
    # stored compact (masked vst on a couple of lanes is cheaper than 64x writes).
    out = jnp.dot(h.astype(jnp.bfloat16),
                  w2_ref[...].astype(jnp.bfloat16),
                  preferred_element_type=jnp.float32)
    o_ref[...] = (out + b2_ref[...]).astype(o_ref.dtype)


def pgn_forward(x, w1, b1, w2, b2, *, block_b=2048):
    """x: (B, input_size) f32. Returns (B, nb_actions) f32 logits."""
    B, input_size = x.shape
    hidden = w1.shape[1]
    nb_actions = w2.shape[1]

    # Batch tile: large blocks amortize per-grid-step overhead; for mid-size
    # batches guarantee >= 2 grid blocks so the "parallel" axis can use both
    # TensorCores on v7x.  No padding of x: the tail block may be partial.
    tb = min(block_b, max(8, _round_up(pl.cdiv(B, 2), 8)))
    grid = (pl.cdiv(B, tb),)

    out = pl.pallas_call(
        pgn_kernel,
        out_shape=jax.ShapeDtypeStruct((B, nb_actions), jnp.float32),
        grid=grid,
        in_specs=[
            pl.BlockSpec((tb, input_size), lambda i: (i, 0)),        # x: streamed
            pl.BlockSpec((input_size, hidden), lambda i: (0, 0)),    # w1: resident
            pl.BlockSpec((1, hidden), lambda i: (0, 0)),             # b1: resident
            pl.BlockSpec((hidden, nb_actions), lambda i: (0, 0)),    # w2: resident
            pl.BlockSpec((1, nb_actions), lambda i: (0, 0)),         # b2: resident
        ],
        out_specs=pl.BlockSpec((tb, nb_actions), lambda i: (i, 0)),
        compiler_params=pltpu.CompilerParams(
            # Batch blocks are independent -> shard across TensorCores (v7x).
            dimension_semantics=("parallel",),
        ),
    )(x, w1, b1, w2, b2)

    return out


def init_params(key, input_size, nb_actions, hidden=128):
    """Deterministic init mimicking nn.Linear's U(-1/sqrt(fan_in), 1/sqrt(fan_in))."""
    k1, k2, k3, k4 = jax.random.split(key, 4)
    lim1 = 1.0 / jnp.sqrt(jnp.float32(input_size))
    lim2 = 1.0 / jnp.sqrt(jnp.float32(hidden))
    w1 = jax.random.uniform(k1, (input_size, hidden), jnp.float32, -lim1, lim1)
    b1 = jax.random.uniform(k2, (1, hidden), jnp.float32, -lim1, lim1)
    w2 = jax.random.uniform(k3, (hidden, nb_actions), jnp.float32, -lim2, lim2)
    b2 = jax.random.uniform(k4, (1, nb_actions), jnp.float32, -lim2, lim2)
    return w1, b1, w2, b2


def _ref_forward(x, w1, b1, w2, b2):
    return jnp.maximum(x @ w1 + b1, 0.0) @ w2 + b2


if __name__ == "__main__":
    # CartPole-like sizes: observation dim 4, 2 actions.
    input_size, nb_actions = 4, 2

    key = jax.random.PRNGKey(0)
    kx, kp, kb = jax.random.split(key, 3)
    w1, b1, w2, b2 = init_params(kp, input_size, nb_actions)

    # bf16 MXU operands perturb logits at ~1e-3..1e-2 relative precision.
    TOL = dict(atol=3e-2, rtol=3e-2)

    # Small batch (single grid step).
    x_small = jax.random.normal(kx, (8, input_size), dtype=jnp.float32)
    out_small = jax.block_until_ready(pgn_forward(x_small, w1, b1, w2, b2))
    ref_small = _ref_forward(x_small, w1, b1, w2, b2)
    assert out_small.shape == (8, nb_actions)
    assert jnp.allclose(out_small, ref_small, **TOL)

    # Larger batch: 2 grid blocks with a non-divisible (partial) tail block.
    x_big = jax.random.normal(kb, (1000, input_size), dtype=jnp.float32)
    out_big = jax.block_until_ready(pgn_forward(x_big, w1, b1, w2, b2))
    ref_big = _ref_forward(x_big, w1, b1, w2, b2)
    assert out_big.shape == (1000, nb_actions)
    assert jnp.allclose(out_big, ref_big, **TOL)

    print("KERNEL_OK")
</pallas_src>

<mosaic_0001>
module attributes {stable_mosaic.version = 11 : i64} {
  func.func @pgn_kernel(%arg0: i32, %arg1: memref<8x4xf32, #tpu.memory_space<vmem>>, %arg2: memref<4x128xf32, #tpu.memory_space<vmem>>, %arg3: memref<1x128xf32, #tpu.memory_space<vmem>>, %arg4: memref<128x2xf32, #tpu.memory_space<vmem>>, %arg5: memref<1x2xf32, #tpu.memory_space<vmem>>, %arg6: memref<8x2xf32, #tpu.memory_space<vmem>>) attributes {dimension_semantics = [#tpu.dimension_semantics<parallel>], iteration_bounds = array<i64: 1>, scalar_prefetch = 0 : i64, scratch_operands = 0 : i64, tpu.core_type = #tpu.core_type<tc>, window_params = [{transform_indices = @transform_0, window_bounds = array<i64: 8, 4>}, {pipeline_mode = #tpu.pipeline_mode<synchronous>, transform_indices = @transform_1, window_bounds = array<i64: 4, 128>}, {pipeline_mode = #tpu.pipeline_mode<synchronous>, transform_indices = @transform_2, window_bounds = array<i64: 1, 128>}, {pipeline_mode = #tpu.pipeline_mode<synchronous>, transform_indices = @transform_3, window_bounds = array<i64: 128, 2>}, {pipeline_mode = #tpu.pipeline_mode<synchronous>, transform_indices = @transform_4, window_bounds = array<i64: 1, 2>}, {transform_indices = @transform_5, window_bounds = array<i64: 8, 2>}]} {
    %c0 = arith.constant 0 : index
    %c0_0 = arith.constant 0 : index
    %0 = vector.load %arg1[%c0, %c0_0] : memref<8x4xf32, #tpu.memory_space<vmem>>, vector<8x4xf32>
    %1 = arith.truncf %0 : vector<8x4xf32> to vector<8x4xbf16>
    %c0_1 = arith.constant 0 : index
    %c0_2 = arith.constant 0 : index
    %2 = vector.load %arg2[%c0_1, %c0_2] : memref<4x128xf32, #tpu.memory_space<vmem>>, vector<4x128xf32>
    %3 = arith.truncf %2 : vector<4x128xf32> to vector<4x128xbf16>
    %cst = arith.constant dense<0.000000e+00> : vector<8x128xf32>
    %4 = tpu.matmul %1, %3, %cst {dimension_numbers = #tpu.dot_dimension_numbers<[1], [0], [0], [1], [0, 0, 1, 1], [], []>} : vector<8x4xbf16>, vector<4x128xbf16>, vector<8x128xf32> -> vector<8x128xf32>
    %c0_3 = arith.constant 0 : index
    %c0_4 = arith.constant 0 : index
    %5 = vector.load %arg3[%c0_3, %c0_4] : memref<1x128xf32, #tpu.memory_space<vmem>>, vector<1x128xf32>
    %6 = vector.broadcast %5 : vector<1x128xf32> to vector<8x128xf32>
    %7 = arith.addf %4, %6 : vector<8x128xf32>
    %cst_5 = arith.constant 0.000000e+00 : f32
    %8 = vector.broadcast %cst_5 : f32 to vector<8x128xf32>
    %9 = arith.maximumf %7, %8 : vector<8x128xf32>
    %10 = arith.truncf %9 : vector<8x128xf32> to vector<8x128xbf16>
    %c0_6 = arith.constant 0 : index
    %c0_7 = arith.constant 0 : index
    %11 = vector.load %arg4[%c0_6, %c0_7] : memref<128x2xf32, #tpu.memory_space<vmem>>, vector<128x2xf32>
    %12 = arith.truncf %11 : vector<128x2xf32> to vector<128x2xbf16>
    %cst_8 = arith.constant dense<0.000000e+00> : vector<8x2xf32>
    %13 = tpu.matmul %10, %12, %cst_8 {dimension_numbers = #tpu.dot_dimension_numbers<[1], [0], [0], [1], [0, 0, 1, 1], [], []>} : vector<8x128xbf16>, vector<128x2xbf16>, vector<8x2xf32> -> vector<8x2xf32>
    %c0_9 = arith.constant 0 : index
    %c0_10 = arith.constant 0 : index
    %14 = vector.load %arg5[%c0_9, %c0_10] : memref<1x2xf32, #tpu.memory_space<vmem>>, vector<1x2xf32>
    %15 = vector.broadcast %14 : vector<1x2xf32> to vector<8x2xf32>
    %16 = arith.addf %13, %15 : vector<8x2xf32>
    %c0_11 = arith.constant 0 : index
    %c0_12 = arith.constant 0 : index
    %17 = vector.load %arg6[%c0_11, %c0_12] : memref<8x2xf32, #tpu.memory_space<vmem>>, vector<8x2xf32>
    tpu.vector_store %arg6[%c0_11, %c0_12], %16 {strides = array<i32>} : memref<8x2xf32, #tpu.memory_space<vmem>>, vector<8x2xf32>,
    return
  }
  func.func @transform_0(%arg0: i32) -> (i32, i32) {
    %c0_i32 = arith.constant 0 : i32
    %c0_i32_0 = arith.constant 0 : i32
    return %arg0, %c0_i32 : i32, i32
  }
  func.func @transform_1(%arg0: i32) -> (i32, i32) {
    %c0_i32 = arith.constant 0 : i32
    %c0_i32_0 = arith.constant 0 : i32
    %c0_i32_1 = arith.constant 0 : i32
    return %c0_i32, %c0_i32_0 : i32, i32
  }
  func.func @transform_2(%arg0: i32) -> (i32, i32) {
    %c0_i32 = arith.constant 0 : i32
    %c0_i32_0 = arith.constant 0 : i32
    %c0_i32_1 = arith.constant 0 : i32
    return %c0_i32, %c0_i32_0 : i32, i32
  }
  func.func @transform_3(%arg0: i32) -> (i32, i32) {
    %c0_i32 = arith.constant 0 : i32
    %c0_i32_0 = arith.constant 0 : i32
    %c0_i32_1 = arith.constant 0 : i32
    return %c0_i32, %c0_i32_0 : i32, i32
  }
  func.func @transform_4(%arg0: i32) -> (i32, i32) {
    %c0_i32 = arith.constant 0 : i32
    %c0_i32_0 = arith.constant 0 : i32
    %c0_i32_1 = arith.constant 0 : i32
    return %c0_i32, %c0_i32_0 : i32, i32
  }
  func.func @transform_5(%arg0: i32) -> (i32, i32) {
    %c0_i32 = arith.constant 0 : i32
    %c0_i32_0 = arith.constant 0 : i32
    return %arg0, %c0_i32 : i32, i32
  }
}

</mosaic_0001>

<llo_original>
// kernel: tpu_custom_call.1
$region0: #{tpu_custom_call.1}
  #allocation0 [shape = 'u32[]', space=smem, size = 0x4, offset = 0x4, fixed_abs, tag = 'smem constant byte address 0x4 - core index']
  #allocation1 [shape = 'u32[144,128]{1,0:T(1,128)}', space=vmem, size = 0x12000, scoped, tag = 'internal scratch']
  %s0 = inlined_call_operand.vmem [shape: f32[8,4], index: 0, kind: input, shape index: {}]
  %s1 = inlined_call_operand.vmem [shape: f32[4,128], index: 1, kind: input, shape index: {}]
  %s2 = inlined_call_operand.vmem [shape: f32[1,128], index: 2, kind: input, shape index: {}]
  %s3 = inlined_call_operand.vmem [shape: f32[128,2], index: 3, kind: input, shape index: {}]
  %s4 = inlined_call_operand.vmem [shape: f32[1,2], index: 4, kind: input, shape index: {}]
  %s5 = inlined_call_operand.vmem [shape: f32[8,2], index: 5, kind: output, shape index: {}]
  %s6 = sld [smem:[#allocation0]]
  $region30: #{tpu_custom_call.1} parent=0
    _
  %s8 = ssub.s32 1, %s6
  %s9 = scalar_select 0, %s8, %s6
  // Predicated region
  $region2: #{tpu_custom_call.1} parent=0 // pred_check
    _
  $region3: #{tpu_custom_call.1} parent=0 // pred_check_branch
    %11 = sbr.rel (0) target = $region5
  $region4: #{tpu_custom_call.1} parent=0 // pred_region
    _
  $region5: #{tpu_custom_call.1} parent=0 // pred_fallthru
    _
  // Predicated region
  $region6: #{tpu_custom_call.1} parent=0 // pred_check
    _
  $region7: #{tpu_custom_call.1} parent=0 // pred_check_branch
    %13 = sbr.rel (0) target = $region9
  $region8: #{tpu_custom_call.1} parent=0 // pred_region
    _
  $region9: #{tpu_custom_call.1} parent=0 // pred_fallthru
    _
  // Predicated region
  $region10: #{tpu_custom_call.1} parent=0 // pred_check
    _
  $region11: #{tpu_custom_call.1} parent=0 // pred_check_branch
    %15 = sbr.rel (0) target = $region13
  $region12: #{tpu_custom_call.1} parent=0 // pred_region
    _
  $region13: #{tpu_custom_call.1} parent=0 // pred_fallthru
    _
  // Predicated region
  $region14: #{tpu_custom_call.1} parent=0 // pred_check
    _
  $region15: #{tpu_custom_call.1} parent=0 // pred_check_branch
    %17 = sbr.rel (0) target = $region17
  $region16: #{tpu_custom_call.1} parent=0 // pred_region
    _
  $region17: #{tpu_custom_call.1} parent=0 // pred_fallthru
    _
  // Predicated region
  $region18: #{tpu_custom_call.1} parent=0 // pred_check
    _
  $region19: #{tpu_custom_call.1} parent=0 // pred_check_branch
    %19 = sbr.rel (0) target = $region21
  $region20: #{tpu_custom_call.1} parent=0 // pred_region
    _
  $region21: #{tpu_custom_call.1} parent=0 // pred_fallthru
    _
  %v21 = vld [vmem:[%s0] sm:$0xff]
  %v22 = vpack.c.bf16 %v21, %v21
  %v23 = vld [vmem:[%s1] sm:$0xf]
  %v24 = vpack.c.bf16 %v23, %v23
  %v25 = vld [vmem:[%s2] sm:$0x1]
  %v27 = vlaneseq
  %v28 = vshrl.u32 %v27, 7
  %v29 = vsub.s32 0, %v28
  %v30 = vrot.slane %v25, %v29
  %vm32 = vcmask 31744
  %v34 = vsel %vm32, %v22, 0
  %vm36 = vcmask 1041408
  %v38 = vsel %vm36, %v24, 0
  %40 = vmatprep.subr.bf16.mxu0 0
  %41 = vmatpush1.bf16.msra.mxu0 %v38
  %42 = vmatprep.subr.bf16.mxu0 0
  %43 = vmatpush1.bf16.msra.mxu0 0
  %44 = vmatprep.subr.bf16.mxu0 0
  %45 = vmatpush1.bf16.msra.mxu0 0
  %46 = vmatprep.subr.bf16.mxu0 0
  %47 = vmatpush1.bf16.msra.mxu0 0
  %48 = vmatprep.subr.bf16.mxu0 0
  %49 = vmatpush1.bf16.msra.mxu0 0
  %50 = vmatprep.subr.bf16.mxu0 0
  %51 = vmatpush1.bf16.msra.mxu0 0
  %52 = vmatprep.subr.bf16.mxu0 0
  %53 = vmatpush1.bf16.msra.mxu0 0
  %54 = vmatprep.subr.bf16.mxu0 0
  %55 = vmatpush1.bf16.msra.mxu0 0
  %56 = vmatprep.subr.bf16.mxu0 0
  %57 = vmatpush1.bf16.msra.mxu0 0
  %58 = vmatprep.subr.bf16.mxu0 0
  %59 = vmatpush1.bf16.msra.mxu0 0
  %60 = vmatprep.subr.bf16.mxu0 0
  %61 = vmatpush1.bf16.msra.mxu0 0
  %62 = vmatprep.subr.bf16.mxu0 0
  %63 = vmatpush1.bf16.msra.mxu0 0
  %64 = vmatprep.subr.bf16.mxu0 0
  %65 = vmatpush1.bf16.msra.mxu0 0
  %66 = vmatprep.subr.bf16.mxu0 0
  %67 = vmatpush1.bf16.msra.mxu0 0
  %68 = vmatprep.subr.bf16.mxu0 0
  %69 = vmatpush1.bf16.msra.mxu0 0
  %70 = vmatprep.subr.bf16.mxu0 0
  %71 = vmatpush1.bf16.msra.mxu0 0
  %72 = vmatprep.mubr.bf16.mxu0 0
  %73 = vmatmul.mubr.bf16.gmra.mrb[0].mxu0 %v34
  %v74 = vpop.f32.mrb[0].mxu0
  %v75 = vadd.f32 %v30, %v74
  %v76 = vpop.f32.mrb[0].mxu0
  %v77 = vpop.f32.mrb[0].mxu0
  %v78 = vpop.f32.mrb[0].mxu0
  %79 = vdwg.mxu0
  %v80 = vmax.f32 %v75, 0.0
  %v81 = vpack.c.bf16 %v80, %v80
  %v82 = vld [vmem:[%s3] sm:$0xff]
  %v83 = vld [vmem:[%s3 + $0x8] sm:$0xff]
  %v84 = vld [vmem:[%s3 + $0x10] sm:$0xff]
  %v85 = vld [vmem:[%s3 + $0x18] sm:$0xff]
  %v86 = vld [vmem:[%s3 + $0x20] sm:$0xff]
  %v87 = vld [vmem:[%s3 + $0x28] sm:$0xff]
  %v88 = vld [vmem:[%s3 + $0x30] sm:$0xff]
  %v89 = vld [vmem:[%s3 + $0x38] sm:$0xff]
  %v90 = vld [vmem:[%s3 + $0x40] sm:$0xff]
  %v91 = vld [vmem:[%s3 + $0x48] sm:$0xff]
  %v92 = vld [vmem:[%s3 + $0x50] sm:$0xff]
  %v93 = vld [vmem:[%s3 + $0x58] sm:$0xff]
  %v94 = vld [vmem:[%s3 + $0x60] sm:$0xff]
  %v95 = vld [vmem:[%s3 + $0x68] sm:$0xff]
  %v96 = vld [vmem:[%s3 + $0x70] sm:$0xff]
  %v97 = vld [vmem:[%s3 + $0x78] sm:$0xff]
  %v98 = vpack.c.bf16 %v83, %v82
  %v99 = vpack.c.bf16 %v85, %v84
  %v100 = vpack.c.bf16 %v87, %v86
  %v101 = vpack.c.bf16 %v89, %v88
  %v102 = vpack.c.bf16 %v91, %v90
  %v103 = vpack.c.bf16 %v93, %v92
  %v104 = vpack.c.bf16 %v95, %v94
  %v105 = vpack.c.bf16 %v97, %v96
  %v106 = vld [vmem:[%s4] sm:$0x1]
  %v108 = vlaneseq
  %v109 = vshrl.u32 %v108, 7
  %v110 = vsub.s32 0, %v109
  %v111 = vrot.slane %v106, %v110
  %113 = vmatprep.subr.bf16.mxu0 0
  %114 = vmatpush1.bf16.msra.mxu0 %v98
  %115 = vmatprep.subr.bf16.mxu0 0
  %116 = vmatpush1.bf16.msra.mxu0 %v99
  %117 = vmatprep.subr.bf16.mxu0 0
  %118 = vmatpush1.bf16.msra.mxu0 %v100
  %119 = vmatprep.subr.bf16.mxu0 0
  %120 = vmatpush1.bf16.msra.mxu0 %v101
  %121 = vmatprep.subr.bf16.mxu0 0
  %122 = vmatpush1.bf16.msra.mxu0 %v102
  %123 = vmatprep.subr.bf16.mxu0 0
  %124 = vmatpush1.bf16.msra.mxu0 %v103
  %125 = vmatprep.subr.bf16.mxu0 0
  %126 = vmatpush1.bf16.msra.mxu0 %v104
  %127 = vmatprep.subr.bf16.mxu0 0
  %128 = vmatpush1.bf16.msra.mxu0 %v105
  %129 = vmatprep.subr.bf16.mxu0 0
  %130 = vmatpush1.bf16.msra.mxu0 0
  %131 = vmatprep.subr.bf16.mxu0 0
  %132 = vmatpush1.bf16.msra.mxu0 0
  %133 = vmatprep.subr.bf16.mxu0 0
  %134 = vmatpush1.bf16.msra.mxu0 0
  %135 = vmatprep.subr.bf16.mxu0 0
  %136 = vmatpush1.bf16.msra.mxu0 0
  %137 = vmatprep.subr.bf16.mxu0 0
  %138 = vmatpush1.bf16.msra.mxu0 0
  %139 = vmatprep.subr.bf16.mxu0 0
  %140 = vmatpush1.bf16.msra.mxu0 0
  %141 = vmatprep.subr.bf16.mxu0 0
  %142 = vmatpush1.bf16.msra.mxu0 0
  %143 = vmatprep.subr.bf16.mxu0 0
  %144 = vmatpush1.bf16.msra.mxu0 0
  %145 = vmatprep.mubr.bf16.mxu0 0
  %146 = vmatmul.mubr.bf16.gmra.mrb[0].mxu0 %v81
  %v147 = vpop.f32.mrb[0].mxu0
  %v148 = vadd.f32 %v111, %v147
  %v149 = vpop.f32.mrb[0].mxu0
  %v150 = vpop.f32.mrb[0].mxu0
  %v151 = vpop.f32.mrb[0].mxu0
  %152 = vdwg.mxu0
  %vm153 = vcmask 15360
  %154 = vst.msk [vmem:[%s5] sm:$0xff] %vm153, %v148
  // Predicated region
  $region22: #{tpu_custom_call.1} parent=0 // pred_check
    _
  $region23: #{tpu_custom_call.1} parent=0 // pred_check_branch
    %156 = sbr.rel (0) target = $region25
  $region24: #{tpu_custom_call.1} parent=0 // pred_region
    _
  $region25: #{tpu_custom_call.1} parent=0 // pred_fallthru
    _
  // Predicated region
  $region26: #{tpu_custom_call.1} parent=0 // pred_check
    _
  $region27: #{tpu_custom_call.1} parent=0 // pred_check_branch
    %158 = sbr.rel (0) target = $region29
  $region28: #{tpu_custom_call.1} parent=0 // pred_region
    _
  $region29: #{tpu_custom_call.1} parent=0 // pred_fallthru
    _

</llo_original>
